<compile_context>
chip_gen: v7x
topology: tpu7x:2x2x1
jax: 0.10.0
libtpu: 0.0.40
codegen_flags: <defaults>
</compile_context>

<pallas_src>
import functools

import jax
import jax.numpy as jnp
from jax.experimental import pallas as pl
from jax.experimental.pallas import tpu as pltpu


def _round_up(a, m):
    return ((a + m - 1) // m) * m


def _cdiv(a, b):
    return -(-a // b)


def _num_tensorcores_per_device():
    """Best-effort TensorCores-per-visible-device (megacore) detection."""
    try:
        kind = str(getattr(jax.devices()[0], "device_kind", "")).lower()
    except Exception:
        return 1
    return 2 if any(t in kind for t in ("v4", "v5p", "v7")) else 1


def _choose_block_b(B, num_tcs, target_block=1024):
    """Pick the batch-tile size: choose the step count first, then the tile.

    - >=2 (even) steps only when there are 2 TensorCores and the batch is
      large enough for the split to pay off (megacore sharding on v7x).
    - bf16 sublane packing => 16-row granularity; no forced 128-row pad for
      tiny batches.
    """
    min_steps = num_tcs if (num_tcs > 1 and B >= 256) else 1
    n = max(min_steps, _cdiv(B, target_block))
    if num_tcs > 1 and n > 1:
        n = _round_up(n, num_tcs)          # balanced split across both TCs
    return _round_up(_cdiv(B, n), 16)


def soft_order_kernel(x_ref, ic_ref, oc_ref, wcat_ref, bcat_ref, o_ref,
                      *, num_core_layers, hidden_size):
    """One batch tile of the SoftOrderModel forward pass.

    x_ref    : (TB, Din)     VMEM  bf16 input batch tile
    ic_ref   : (Din, H)      VMEM  bf16 input_contexts[0].T
    oc_ref   : (H, Dp)       VMEM  bf16 output_contexts[0], lane-padded
    wcat_ref : (L, H, L*H)   VMEM  bf16 per-depth softmax-scaled core weights
                                   wcat[d, :, l*H:(l+1)*H] == soft[d,l]*W_l.T
    bcat_ref : (L, 1, L*H)   VMEM  f32  per-depth softmax-scaled core biases
    o_ref    : (TB, Dp)      VMEM  output tile
    """
    L, H = num_core_layers, hidden_size

    # x = F.linear(input_batch, input_contexts[0]) == x @ ic.T (ic already
    # transposed in the wrapper -> plain matmul on the MXU).
    h = jnp.dot(x_ref[...], ic_ref[...], preferred_element_type=jnp.float32)

    for depth in range(L):
        # All L (softmax-scaled) core layers of this depth as ONE wide matmul:
        # (TB, H) @ (H, L*H) with f32 accumulation.
        y = jnp.dot(h.astype(jnp.bfloat16), wcat_ref[depth],
                    preferred_element_type=jnp.float32)           # (TB, L*H)
        # Bias differs per depth after the softmax fold, so its broadcast is
        # genuinely per-iteration work (nothing to hoist).
        y = jnp.maximum(y + bcat_ref[depth], 0.0)                 # bias + ReLU
        # dropout(p=0.0) is the identity.
        # Softmax mixing is folded into wcat/bcat; the mix is a plain sum of
        # the L lane-aligned H-wide slices.
        h = y[:, 0:H]
        for layer in range(1, L):
            h = h + y[:, layer * H:(layer + 1) * H]

    # x = F.linear(x, output_contexts[0].t()) == x @ output_contexts[0]
    o_ref[...] = jnp.dot(h.astype(jnp.bfloat16), oc_ref[...],
                         preferred_element_type=jnp.float32).astype(o_ref.dtype)


def soft_order_forward(x, input_context, output_context, core_w, core_b,
                       task_scalars, *, block_b=None, out_dtype=jnp.float32):
    """SoftOrderModel.forward for one task.

    x              : (B, Din)
    input_context  : (H, Din)   == input_contexts[0]  (PyTorch weight layout)
    output_context : (H, Dout)  == output_contexts[0]
    core_w         : (L, H, H)  stacked nn.Linear weights (out, in)
    core_b         : (L, H)     stacked nn.Linear biases
    task_scalars   : (L, L)     == self.scalars[task_idx]
    """
    B, Din = x.shape
    H = input_context.shape[0]
    Dout = output_context.shape[1]
    L = core_w.shape[0]

    # ---- host-side prep (done once by XLA, not per grid step) ------------
    # Fold softmax(task_scalars) into the core weights / biases.  Softmax
    # weights are >= 0, so  soft * ReLU(W x + b) == ReLU((soft*W) x + soft*b).
    # Scale in f32 BEFORE the bf16 cast.
    soft = jax.nn.softmax(task_scalars.astype(jnp.float32), axis=-1)   # (L, L)
    w_t = jnp.transpose(core_w.astype(jnp.float32), (0, 2, 1))         # (L,H,H)
    # wcat[d, :, l*H:(l+1)*H] == soft[d, l] * core_w[l].T
    wcat = jnp.einsum('dl,lij->dilj', soft, w_t).reshape(L, H, L * H)
    wcat = wcat.astype(jnp.bfloat16)                                   # (L,H,LH)
    bcat = (soft[:, :, None] * core_b.astype(jnp.float32)[None, :, :])
    bcat = bcat.reshape(L, 1, L * H).astype(jnp.float32)               # (L,1,LH)

    # Pre-transpose the input context so the kernel does plain x @ W.
    ic_t = jnp.transpose(input_context).astype(jnp.bfloat16)           # (Din, H)

    # Lane-dense output: pad the final projection to a multiple of 128 lanes.
    Dp = _round_up(Dout, 128)
    oc = jnp.pad(output_context.astype(jnp.bfloat16),
                 ((0, 0), (0, Dp - Dout)))                             # (H, Dp)

    # Batch tiling: step count first, then a 16-row-granular tile.
    num_tcs = _num_tensorcores_per_device()
    if block_b is None:
        block_b = _choose_block_b(B, num_tcs)
    Bp = _round_up(B, block_b)
    grid = (Bp // block_b,)
    xp = jnp.pad(x.astype(jnp.bfloat16), ((0, Bp - B), (0, 0)))        # (Bp,Din)

    # VMEM budget: double-buffered x/out tiles + (double-buffered) invariant
    # weights + f32/bf16 intermediates, x2 headroom; floor 16 MiB, cap 48 MiB.
    tile_bytes = block_b * Din * 2 + block_b * Dp * 4
    weight_bytes = (Din * H * 2 + H * Dp * 2
                    + L * H * (L * H) * 2 + L * (L * H) * 4)
    inter_bytes = block_b * (L * H) * 6 + block_b * H * 6
    vmem_limit = 2 * (2 * tile_bytes + 2 * weight_bytes + inter_bytes)
    vmem_limit = max(16 * 1024 * 1024, min(48 * 1024 * 1024, vmem_limit))

    kernel = functools.partial(soft_order_kernel,
                               num_core_layers=L, hidden_size=H)

    out = pl.pallas_call(
        kernel,
        out_shape=jax.ShapeDtypeStruct((Bp, Dp), out_dtype),
        grid_spec=pltpu.PrefetchScalarGridSpec(
            num_scalar_prefetch=0,
            grid=grid,
            in_specs=[
                pl.BlockSpec((block_b, Din), lambda i: (i, 0)),     # x tile
                pl.BlockSpec((Din, H), lambda i: (0, 0)),           # ic.T
                pl.BlockSpec((H, Dp), lambda i: (0, 0)),            # out ctx
                pl.BlockSpec((L, H, L * H), lambda i: (0, 0, 0)),   # scaled W
                pl.BlockSpec((L, 1, L * H), lambda i: (0, 0, 0)),   # scaled b
            ],
            out_specs=pl.BlockSpec((block_b, Dp), lambda i: (i, 0)),
        ),
        compiler_params=pltpu.CompilerParams(
            dimension_semantics=("parallel",),
            vmem_limit_bytes=vmem_limit),
    )(xp, ic_t, oc, wcat, bcat)

    # NOTE: padded rows/lanes contain garbage (ReLU of bias propagated); they
    # must be sliced off here and the padded buffer never consumed directly.
    return out[:B, :Dout]


def soft_order_reference(x, input_context, output_context, core_w, core_b,
                         task_scalars):
    """Pure-JAX f32 reference matching the PyTorch forward."""
    h = x @ input_context.T
    L = core_w.shape[0]
    soft = jax.nn.softmax(task_scalars, axis=-1)
    for depth in range(L):
        acc = jnp.zeros_like(h)
        for layer in range(L):
            y = jnp.maximum(h @ core_w[layer].T + core_b[layer], 0.0)
            acc = acc + soft[depth, layer] * y
        h = acc
    return h @ output_context


if __name__ == "__main__":
    # Small, deterministic synthetic setup consistent with the module.
    B, Din, H, Dout = 8, 32, 128, 64
    num_core_layers, num_tasks = 3, 4
    task_idx = 1

    key = jax.random.PRNGKey(0)
    ks = jax.random.split(key, 6)
    x = jax.random.normal(ks[0], (B, Din), jnp.float32)
    input_contexts = 0.1 * jax.random.normal(ks[1], (1, H, Din), jnp.float32)
    output_contexts = 0.1 * jax.random.normal(ks[2], (1, H, Dout), jnp.float32)
    core_w = jax.random.normal(ks[3], (num_core_layers, H, H),
                               jnp.float32) / jnp.sqrt(float(H))
    core_b = 0.01 * jax.random.normal(ks[4], (num_core_layers, H), jnp.float32)
    scalars = jax.random.normal(ks[5],
                                (num_tasks, num_core_layers, num_core_layers),
                                jnp.float32)

    out = soft_order_forward(x, input_contexts[0], output_contexts[0],
                             core_w, core_b, scalars[task_idx])
    out = jax.block_until_ready(out)

    ref = soft_order_reference(x, input_contexts[0], output_contexts[0],
                               core_w, core_b, scalars[task_idx])
    assert out.shape == (B, Dout)
    # bf16 MXU inputs (f32 accumulation) -> ~1% relative error budget.
    assert jnp.allclose(out, ref, rtol=2e-2, atol=2e-2), "mismatch vs reference"

    print("KERNEL_OK")
</pallas_src>

<mosaic_0001>
module attributes {stable_mosaic.version = 11 : i64} {
  func.func @soft_order_kernel(%arg0: i32, %arg1: memref<16x32xbf16, #tpu.memory_space<vmem>>, %arg2: memref<32x128xbf16, #tpu.memory_space<vmem>>, %arg3: memref<128x128xbf16, #tpu.memory_space<vmem>>, %arg4: memref<3x128x384xbf16, #tpu.memory_space<vmem>>, %arg5: memref<3x1x384xf32, #tpu.memory_space<vmem>>, %arg6: memref<16x128xf32, #tpu.memory_space<vmem>>) attributes {dimension_semantics = [#tpu.dimension_semantics<parallel>], iteration_bounds = array<i64: 1>, scalar_prefetch = 0 : i64, scratch_operands = 0 : i64, tpu.core_type = #tpu.core_type<tc>, window_params = [{transform_indices = @transform_0, window_bounds = array<i64: 16, 32>}, {pipeline_mode = #tpu.pipeline_mode<synchronous>, transform_indices = @transform_1, window_bounds = array<i64: 32, 128>}, {pipeline_mode = #tpu.pipeline_mode<synchronous>, transform_indices = @transform_2, window_bounds = array<i64: 128, 128>}, {pipeline_mode = #tpu.pipeline_mode<synchronous>, transform_indices = @transform_3, window_bounds = array<i64: 3, 128, 384>}, {pipeline_mode = #tpu.pipeline_mode<synchronous>, transform_indices = @transform_4, window_bounds = array<i64: 3, 1, 384>}, {transform_indices = @transform_5, window_bounds = array<i64: 16, 128>}]} {
    %c0 = arith.constant 0 : index
    %c0_0 = arith.constant 0 : index
    %0 = vector.load %arg1[%c0, %c0_0] : memref<16x32xbf16, #tpu.memory_space<vmem>>, vector<16x32xbf16>
    %c0_1 = arith.constant 0 : index
    %c0_2 = arith.constant 0 : index
    %1 = vector.load %arg2[%c0_1, %c0_2] : memref<32x128xbf16, #tpu.memory_space<vmem>>, vector<32x128xbf16>
    %cst = arith.constant dense<0.000000e+00> : vector<16x128xf32>
    %2 = tpu.matmul %0, %1, %cst {dimension_numbers = #tpu.dot_dimension_numbers<[1], [0], [0], [1], [0, 0, 1, 1], [], []>} : vector<16x32xbf16>, vector<32x128xbf16>, vector<16x128xf32> -> vector<16x128xf32>
    %3 = arith.truncf %2 : vector<16x128xf32> to vector<16x128xbf16>
    %c0_3 = arith.constant 0 : index
    %c0_4 = arith.constant 0 : index
    %c0_5 = arith.constant 0 : index
    %4 = vector.load %arg4[%c0_3, %c0_4, %c0_5] : memref<3x128x384xbf16, #tpu.memory_space<vmem>>, vector<1x128x384xbf16>
    %5 = vector.shape_cast %4 : vector<1x128x384xbf16> to vector<128x384xbf16>
    %cst_6 = arith.constant dense<0.000000e+00> : vector<16x384xf32>
    %6 = tpu.matmul %3, %5, %cst_6 {dimension_numbers = #tpu.dot_dimension_numbers<[1], [0], [0], [1], [0, 0, 1, 1], [], []>} : vector<16x128xbf16>, vector<128x384xbf16>, vector<16x384xf32> -> vector<16x384xf32>
    %c0_7 = arith.constant 0 : index
    %c0_8 = arith.constant 0 : index
    %c0_9 = arith.constant 0 : index
    %7 = vector.load %arg5[%c0_7, %c0_8, %c0_9] : memref<3x1x384xf32, #tpu.memory_space<vmem>>, vector<1x1x384xf32>
    %8 = vector.shape_cast %7 : vector<1x1x384xf32> to vector<1x384xf32>
    %9 = vector.broadcast %8 : vector<1x384xf32> to vector<16x384xf32>
    %10 = arith.addf %6, %9 : vector<16x384xf32>
    %cst_10 = arith.constant 0.000000e+00 : f32
    %11 = vector.broadcast %cst_10 : f32 to vector<16x384xf32>
    %12 = arith.maximumf %10, %11 : vector<16x384xf32>
    %13 = vector.extract_strided_slice %12 {offsets = [0, 0], sizes = [16, 128], strides = [1, 1]} : vector<16x384xf32> to vector<16x128xf32>
    %14 = vector.extract_strided_slice %12 {offsets = [0, 128], sizes = [16, 128], strides = [1, 1]} : vector<16x384xf32> to vector<16x128xf32>
    %15 = arith.addf %13, %14 : vector<16x128xf32>
    %16 = vector.extract_strided_slice %12 {offsets = [0, 256], sizes = [16, 128], strides = [1, 1]} : vector<16x384xf32> to vector<16x128xf32>
    %17 = arith.addf %15, %16 : vector<16x128xf32>
    %18 = arith.truncf %17 : vector<16x128xf32> to vector<16x128xbf16>
    %c1 = arith.constant 1 : index
    %c0_11 = arith.constant 0 : index
    %c0_12 = arith.constant 0 : index
    %19 = vector.load %arg4[%c1, %c0_11, %c0_12] : memref<3x128x384xbf16, #tpu.memory_space<vmem>>, vector<1x128x384xbf16>
    %20 = vector.shape_cast %19 : vector<1x128x384xbf16> to vector<128x384xbf16>
    %cst_13 = arith.constant dense<0.000000e+00> : vector<16x384xf32>
    %21 = tpu.matmul %18, %20, %cst_13 {dimension_numbers = #tpu.dot_dimension_numbers<[1], [0], [0], [1], [0, 0, 1, 1], [], []>} : vector<16x128xbf16>, vector<128x384xbf16>, vector<16x384xf32> -> vector<16x384xf32>
    %c1_14 = arith.constant 1 : index
    %c0_15 = arith.constant 0 : index
    %c0_16 = arith.constant 0 : index
    %22 = vector.load %arg5[%c1_14, %c0_15, %c0_16] : memref<3x1x384xf32, #tpu.memory_space<vmem>>, vector<1x1x384xf32>
    %23 = vector.shape_cast %22 : vector<1x1x384xf32> to vector<1x384xf32>
    %24 = vector.broadcast %23 : vector<1x384xf32> to vector<16x384xf32>
    %25 = arith.addf %21, %24 : vector<16x384xf32>
    %cst_17 = arith.constant 0.000000e+00 : f32
    %26 = vector.broadcast %cst_17 : f32 to vector<16x384xf32>
    %27 = arith.maximumf %25, %26 : vector<16x384xf32>
    %28 = vector.extract_strided_slice %27 {offsets = [0, 0], sizes = [16, 128], strides = [1, 1]} : vector<16x384xf32> to vector<16x128xf32>
    %29 = vector.extract_strided_slice %27 {offsets = [0, 128], sizes = [16, 128], strides = [1, 1]} : vector<16x384xf32> to vector<16x128xf32>
    %30 = arith.addf %28, %29 : vector<16x128xf32>
    %31 = vector.extract_strided_slice %27 {offsets = [0, 256], sizes = [16, 128], strides = [1, 1]} : vector<16x384xf32> to vector<16x128xf32>
    %32 = arith.addf %30, %31 : vector<16x128xf32>
    %33 = arith.truncf %32 : vector<16x128xf32> to vector<16x128xbf16>
    %c2 = arith.constant 2 : index
    %c0_18 = arith.constant 0 : index
    %c0_19 = arith.constant 0 : index
    %34 = vector.load %arg4[%c2, %c0_18, %c0_19] : memref<3x128x384xbf16, #tpu.memory_space<vmem>>, vector<1x128x384xbf16>
    %35 = vector.shape_cast %34 : vector<1x128x384xbf16> to vector<128x384xbf16>
    %cst_20 = arith.constant dense<0.000000e+00> : vector<16x384xf32>
    %36 = tpu.matmul %33, %35, %cst_20 {dimension_numbers = #tpu.dot_dimension_numbers<[1], [0], [0], [1], [0, 0, 1, 1], [], []>} : vector<16x128xbf16>, vector<128x384xbf16>, vector<16x384xf32> -> vector<16x384xf32>
    %c2_21 = arith.constant 2 : index
    %c0_22 = arith.constant 0 : index
    %c0_23 = arith.constant 0 : index
    %37 = vector.load %arg5[%c2_21, %c0_22, %c0_23] : memref<3x1x384xf32, #tpu.memory_space<vmem>>, vector<1x1x384xf32>
    %38 = vector.shape_cast %37 : vector<1x1x384xf32> to vector<1x384xf32>
    %39 = vector.broadcast %38 : vector<1x384xf32> to vector<16x384xf32>
    %40 = arith.addf %36, %39 : vector<16x384xf32>
    %cst_24 = arith.constant 0.000000e+00 : f32
    %41 = vector.broadcast %cst_24 : f32 to vector<16x384xf32>
    %42 = arith.maximumf %40, %41 : vector<16x384xf32>
    %43 = vector.extract_strided_slice %42 {offsets = [0, 0], sizes = [16, 128], strides = [1, 1]} : vector<16x384xf32> to vector<16x128xf32>
    %44 = vector.extract_strided_slice %42 {offsets = [0, 128], sizes = [16, 128], strides = [1, 1]} : vector<16x384xf32> to vector<16x128xf32>
    %45 = arith.addf %43, %44 : vector<16x128xf32>
    %46 = vector.extract_strided_slice %42 {offsets = [0, 256], sizes = [16, 128], strides = [1, 1]} : vector<16x384xf32> to vector<16x128xf32>
    %47 = arith.addf %45, %46 : vector<16x128xf32>
    %48 = arith.truncf %47 : vector<16x128xf32> to vector<16x128xbf16>
    %c0_25 = arith.constant 0 : index
    %c0_26 = arith.constant 0 : index
    %49 = vector.load %arg3[%c0_25, %c0_26] : memref<128x128xbf16, #tpu.memory_space<vmem>>, vector<128x128xbf16>
    %cst_27 = arith.constant dense<0.000000e+00> : vector<16x128xf32>
    %50 = tpu.matmul %48, %49, %cst_27 {dimension_numbers = #tpu.dot_dimension_numbers<[1], [0], [0], [1], [0, 0, 1, 1], [], []>} : vector<16x128xbf16>, vector<128x128xbf16>, vector<16x128xf32> -> vector<16x128xf32>
    %c0_28 = arith.constant 0 : index
    %c0_29 = arith.constant 0 : index
    %51 = vector.load %arg6[%c0_28, %c0_29] : memref<16x128xf32, #tpu.memory_space<vmem>>, vector<16x128xf32>
    tpu.vector_store %arg6[%c0_28, %c0_29], %50 {strides = array<i32>} : memref<16x128xf32, #tpu.memory_space<vmem>>, vector<16x128xf32>,
    return
  }
  func.func @transform_0(%arg0: i32) -> (i32, i32) {
    %c0_i32 = arith.constant 0 : i32
    %c0_i32_0 = arith.constant 0 : i32
    return %arg0, %c0_i32 : i32, i32
  }
  func.func @transform_1(%arg0: i32) -> (i32, i32) {
    %c0_i32 = arith.constant 0 : i32
    %c0_i32_0 = arith.constant 0 : i32
    %c0_i32_1 = arith.constant 0 : i32
    return %c0_i32, %c0_i32_0 : i32, i32
  }
  func.func @transform_2(%arg0: i32) -> (i32, i32) {
    %c0_i32 = arith.constant 0 : i32
    %c0_i32_0 = arith.constant 0 : i32
    %c0_i32_1 = arith.constant 0 : i32
    return %c0_i32, %c0_i32_0 : i32, i32
  }
  func.func @transform_3(%arg0: i32) -> (i32, i32, i32) {
    %c0_i32 = arith.constant 0 : i32
    %c0_i32_0 = arith.constant 0 : i32
    %c0_i32_1 = arith.constant 0 : i32
    %c0_i32_2 = arith.constant 0 : i32
    return %c0_i32, %c0_i32_0, %c0_i32_1 : i32, i32, i32
  }
  func.func @transform_4(%arg0: i32) -> (i32, i32, i32) {
    %c0_i32 = arith.constant 0 : i32
    %c0_i32_0 = arith.constant 0 : i32
    %c0_i32_1 = arith.constant 0 : i32
    %c0_i32_2 = arith.constant 0 : i32
    return %c0_i32, %c0_i32_0, %c0_i32_1 : i32, i32, i32
  }
  func.func @transform_5(%arg0: i32) -> (i32, i32) {
    %c0_i32 = arith.constant 0 : i32
    %c0_i32_0 = arith.constant 0 : i32
    return %arg0, %c0_i32 : i32, i32
  }
}

</mosaic_0001>

<llo_original>
// kernel: tpu_custom_call.1
$region0: #{tpu_custom_call.1}
  #allocation0 [shape = 'u32[]', space=smem, size = 0x4, offset = 0x4, fixed_abs, tag = 'smem constant byte address 0x4 - core index']
  #allocation1 [shape = 'u32[144,128]{1,0:T(1,128)}', space=vmem, size = 0x12000, scoped, tag = 'internal scratch']
  %s0 = inlined_call_operand.hbm [shape: bf16[16,32], index: 0, kind: input, shape index: {}]
  %s1 = inlined_call_operand.hbm [shape: bf16[32,128], index: 1, kind: input, shape index: {}]
  %s2 = inlined_call_operand.hbm [shape: bf16[128,128], index: 2, kind: input, shape index: {}]
  %s3 = inlined_call_operand.hbm [shape: bf16[3,128,384], index: 3, kind: input, shape index: {}]
  %s4 = inlined_call_operand.vmem [shape: f32[3,1,384], index: 4, kind: input, shape index: {}]
  %s5 = inlined_call_operand.hbm [shape: f32[16,128], index: 5, kind: output, shape index: {}]
  %s6 = sld [smem:[#allocation0]]
  $region46: #{tpu_custom_call.1} parent=0
    _
  %s8 = ssub.s32 1, %s6
  %s9 = scalar_select 0, %s8, %s6
  $region1: #{tpu_custom_call.1} parent=0
    #allocation2 [shape = 'u8[4096]{0}', space=vmem, size = 0x1000, scoped, tag = 'input window, operand 0, single buffered']
    #allocation3 [shape = 's32[1]{0}', space=sflag, size = 0x4, scoped, tag = 'scoped memory for tpu_custom_call.1']
    #allocation4 [shape = 's32[1]{0}', space=sflag, size = 0x4, scoped, tag = 'scoped memory for tpu_custom_call.1']
    #allocation5 [shape = 'u8[8192]{0}', space=vmem, size = 0x2000, scoped, tag = 'input window, operand 1, single buffered']
    #allocation6 [shape = 's32[1]{0}', space=sflag, size = 0x4, scoped, tag = 'scoped memory for tpu_custom_call.1']
    #allocation7 [shape = 'u8[32768]{0}', space=vmem, size = 0x8000, scoped, tag = 'input window, operand 2, single buffered']
    #allocation8 [shape = 'u8[294912]{0}', space=vmem, size = 0x48000, scoped, tag = 'input window, operand 3, single buffered']
    #allocation9 [shape = 's32[1]{0}', space=sflag, size = 0x4, scoped, tag = 'scoped memory for tpu_custom_call.1']
    #allocation10 [shape = 'u8[8192]{0}', space=vmem, size = 0x2000, scoped, tag = 'output window, operand 0, single buffered']
    %10 = vsyncpa [#allocation3], 0
    %11 = vsyncpa [#allocation6], 0
    %12 = vsyncpa [#allocation9], 0
    %13 = vsyncpa [#allocation4], 0
    // Predicated region
    $region2: #{tpu_custom_call.1} parent=1 // pred_check
      _
    $region3: #{tpu_custom_call.1} parent=1 // pred_check_branch
      %15 = sbr.rel (0) target = $region5
    $region4: #{tpu_custom_call.1} parent=1 // pred_region
      %s17 = ssub.s32 128, 128
      %18 = vsyncadd [#allocation3], %s17
      %s19 = sshll.u32 [#allocation2], 4
      %s20 = int_to_ptr.vmem [resolvable:$true] %s19
      %25 = dma.hbm_to_vmem [thread:$0]  %s0, 128, %s20, [#allocation3], 64, 64, 4
    $region5: #{tpu_custom_call.1} parent=1 // pred_fallthru
      _
    // Predicated region
    $region6: #{tpu_custom_call.1} parent=1 // pred_check
      _
    $region7: #{tpu_custom_call.1} parent=1 // pred_check_branch
      %27 = sbr.rel (0) target = $region9
    $region8: #{tpu_custom_call.1} parent=1 // pred_region
      %s29 = ssub.s32 256, 256
      %30 = vsyncadd [#allocation6], %s29
      %s31 = sshll.u32 [#allocation5], 4
      %s32 = int_to_ptr.vmem [resolvable:$true] %s31
      %37 = dma.hbm_to_vmem [thread:$0]  %s1, 256, %s32, [#allocation6], 64, 64, 4
    $region9: #{tpu_custom_call.1} parent=1 // pred_fallthru
      _
    // Predicated region
    $region10: #{tpu_custom_call.1} parent=1 // pred_check
      _
    $region11: #{tpu_custom_call.1} parent=1 // pred_check_branch
      %39 = sbr.rel (0) target = $region13
    $region12: #{tpu_custom_call.1} parent=1 // pred_region
      %s41 = ssub.s32 1024, 1024
      %42 = vsyncadd [#allocation6], %s41
      %s43 = sshll.u32 [#allocation7], 4
      %s44 = int_to_ptr.vmem [resolvable:$true] %s43
      %49 = dma.hbm_to_vmem [thread:$0]  %s2, 1024, %s44, [#allocation6], 64, 64, 4
    $region13: #{tpu_custom_call.1} parent=1 // pred_fallthru
      _
    // Predicated region
    $region14: #{tpu_custom_call.1} parent=1 // pred_check
      _
    $region15: #{tpu_custom_call.1} parent=1 // pred_check_branch
      %51 = sbr.rel (0) target = $region17
    $region16: #{tpu_custom_call.1} parent=1 // pred_region
      %s53 = ssub.s32 9216, 9216
      %54 = vsyncadd [#allocation9], %s53
      %s55 = sshll.u32 [#allocation8], 4
      %s56 = int_to_ptr.vmem [resolvable:$true] %s55
      %61 = dma.hbm_to_vmem [thread:$0]  %s3, 9216, %s56, [#allocation9], 192, 192, 12
    $region17: #{tpu_custom_call.1} parent=1 // pred_fallthru
      _
    // Predicated region
    $region18: #{tpu_custom_call.1} parent=1 // pred_check
      _
    $region19: #{tpu_custom_call.1} parent=1 // pred_check_branch
      %63 = sbr.rel (0) target = $region21
    $region20: #{tpu_custom_call.1} parent=1 // pred_region
      _
    $region21: #{tpu_custom_call.1} parent=1 // pred_fallthru
      _
    // Predicated region
    $region22: #{tpu_custom_call.1} parent=1 // pred_check
      _
    $region23: #{tpu_custom_call.1} parent=1 // pred_check_branch
      %65 = sbr.rel (0) target = $region25
    $region24: #{tpu_custom_call.1} parent=1 // pred_region
      %66 = dma.done [#allocation3], 128
    $region25: #{tpu_custom_call.1} parent=1 // pred_fallthru
      _
    // Predicated region
    $region26: #{tpu_custom_call.1} parent=1 // pred_check
      _
    $region27: #{tpu_custom_call.1} parent=1 // pred_check_branch
      %68 = sbr.rel (0) target = $region29
    $region28: #{tpu_custom_call.1} parent=1 // pred_region
      %69 = dma.done [#allocation6], 256
    $region29: #{tpu_custom_call.1} parent=1 // pred_fallthru
      _
    // Predicated region
    $region30: #{tpu_custom_call.1} parent=1 // pred_check
      _
    $region31: #{tpu_custom_call.1} parent=1 // pred_check_branch
      %71 = sbr.rel (0) target = $region33
    $region32: #{tpu_custom_call.1} parent=1 // pred_region
      %72 = dma.done [#allocation6], 1024
    $region33: #{tpu_custom_call.1} parent=1 // pred_fallthru
      _
    // Predicated region
    $region34: #{tpu_custom_call.1} parent=1 // pred_check
      _
    $region35: #{tpu_custom_call.1} parent=1 // pred_check_branch
      %74 = sbr.rel (0) target = $region37
    $region36: #{tpu_custom_call.1} parent=1 // pred_region
      %75 = dma.done [#allocation9], 9216
    $region37: #{tpu_custom_call.1} parent=1 // pred_fallthru
      _
    %v77 = vld [vmem:[#allocation2] sm:$0xf]
    %v78 = vld [vmem:[#allocation2 + $0x4] sm:$0xf]
    %v79 = vld [vmem:[#allocation5] sm:$0xf]
    %v80 = vld [vmem:[#allocation5 + $0x4] sm:$0xf]
    %v81 = vld [vmem:[#allocation5 + $0x8] sm:$0xf]
    %v82 = vld [vmem:[#allocation5 + $0xc] sm:$0xf]
    %v85 = vunpack.c.l.b16 %v77
    %v86 = vunpack.c.l.b16 %v78
    %v87 = vpack.c.b16 %v86, %v85
    %v92 = vunpack.c.l.b16 %v79
    %v93 = vunpack.c.l.b16 %v80
    %v94 = vunpack.c.l.b16 %v81
    %v95 = vunpack.c.l.b16 %v82
    %v96 = vpack.c.b16 %v93, %v92
    %v97 = vpack.c.b16 %v95, %v94
    %vm100 = vcmask 261120
    %v102 = vsel %vm100, %v87, 0
    %104 = vmatprep.subr.bf16.mxu0 0
    %105 = vmatpush1.bf16.msra.mxu0 %v96
    %106 = vmatprep.subr.bf16.mxu0 0
    %107 = vmatpush1.bf16.msra.mxu0 %v97
    %108 = vmatprep.subr.bf16.mxu0 0
    %109 = vmatpush1.bf16.msra.mxu0 0
    %110 = vmatprep.subr.bf16.mxu0 0
    %111 = vmatpush1.bf16.msra.mxu0 0
    %112 = vmatprep.subr.bf16.mxu0 0
    %113 = vmatpush1.bf16.msra.mxu0 0
    %114 = vmatprep.subr.bf16.mxu0 0
    %115 = vmatpush1.bf16.msra.mxu0 0
    %116 = vmatprep.subr.bf16.mxu0 0
    %117 = vmatpush1.bf16.msra.mxu0 0
    %118 = vmatprep.subr.bf16.mxu0 0
    %119 = vmatpush1.bf16.msra.mxu0 0
    %120 = vmatprep.subr.bf16.mxu0 0
    %121 = vmatpush1.bf16.msra.mxu0 0
    %122 = vmatprep.subr.bf16.mxu0 0
    %123 = vmatpush1.bf16.msra.mxu0 0
    %124 = vmatprep.subr.bf16.mxu0 0
    %125 = vmatpush1.bf16.msra.mxu0 0
    %126 = vmatprep.subr.bf16.mxu0 0
    %127 = vmatpush1.bf16.msra.mxu0 0
    %128 = vmatprep.subr.bf16.mxu0 0
    %129 = vmatpush1.bf16.msra.mxu0 0
    %130 = vmatprep.subr.bf16.mxu0 0
    %131 = vmatpush1.bf16.msra.mxu0 0
    %132 = vmatprep.subr.bf16.mxu0 0
    %133 = vmatpush1.bf16.msra.mxu0 0
    %134 = vmatprep.subr.bf16.mxu0 0
    %135 = vmatpush1.bf16.msra.mxu0 0
    %136 = vmatprep.mubr.bf16.mxu0 0
    %137 = vmatmul.mubr.bf16.gmra.mrb[0].mxu0 %v102
    %v138 = vpop.f32.mrb[0].mxu0
    %v139 = vadd.f32 0.0, %v138
    %v140 = vpop.f32.mrb[0].mxu0
    %v141 = vpop.f32.mrb[0].mxu0
    %v142 = vadd.f32 0.0, %v141
    %v143 = vpop.f32.mrb[0].mxu0
    %144 = vdwg.mxu0
    %v145 = vpack.c.bf16 %v142, %v139
    %v146 = vld [vmem:[#allocation8] sm:$0xff]
    %v147 = vld [vmem:[#allocation8 + $0x8] sm:$0xf]
    %v148 = vld [vmem:[#allocation8 + $0xc] sm:$0xff]
    %v149 = vld [vmem:[#allocation8 + $0x14] sm:$0xf]
    %v150 = vld [vmem:[#allocation8 + $0x18] sm:$0xff]
    %v151 = vld [vmem:[#allocation8 + $0x20] sm:$0xf]
    %v152 = vld [vmem:[#allocation8 + $0x24] sm:$0xff]
    %v153 = vld [vmem:[#allocation8 + $0x2c] sm:$0xf]
    %v154 = vld [vmem:[#allocation8 + $0x30] sm:$0xff]
    %v155 = vld [vmem:[#allocation8 + $0x38] sm:$0xf]
    %v156 = vld [vmem:[#allocation8 + $0x3c] sm:$0xff]
    %v157 = vld [vmem:[#allocation8 + $0x44] sm:$0xf]
    %v158 = vld [vmem:[#allocation8 + $0x48] sm:$0xff]
    %v159 = vld [vmem:[#allocation8 + $0x50] sm:$0xf]
    %v160 = vld [vmem:[#allocation8 + $0x54] sm:$0xff]
    %v161 = vld [vmem:[#allocation8 + $0x5c] sm:$0xf]
    %v162 = vld [vmem:[#allocation8 + $0x60] sm:$0xff]
    %v163 = vld [vmem:[#allocation8 + $0x68] sm:$0xf]
    %v164 = vld [vmem:[#allocation8 + $0x6c] sm:$0xff]
    %v165 = vld [vmem:[#allocation8 + $0x74] sm:$0xf]
    %v166 = vld [vmem:[#allocation8 + $0x78] sm:$0xff]
    %v167 = vld [vmem:[#allocation8 + $0x80] sm:$0xf]
    %v168 = vld [vmem:[#allocation8 + $0x84] sm:$0xff]
    %v169 = vld [vmem:[#allocation8 + $0x8c] sm:$0xf]
    %v170 = vld [vmem:[#allocation8 + $0x90] sm:$0xff]
    %v171 = vld [vmem:[#allocation8 + $0x98] sm:$0xf]
    %v172 = vld [vmem:[#allocation8 + $0x9c] sm:$0xff]
    %v173 = vld [vmem:[#allocation8 + $0xa4] sm:$0xf]
    %v174 = vld [vmem:[#allocation8 + $0xa8] sm:$0xff]
    %v175 = vld [vmem:[#allocation8 + $0xb0] sm:$0xf]
    %v176 = vld [vmem:[#allocation8 + $0xb4] sm:$0xff]
    %v177 = vld [vmem:[#allocation8 + $0xbc] sm:$0xf]
    %v178 = vld [vmem:[%s4] sm:$0x7]
    %v180 = vlaneseq
    %v181 = vshrl.u32 %v180, 7
    %v182 = vsub.s32 0, %v181
    %v183 = vrot.slane %v178, %v182
    %v184 = vlaneseq
    %v185 = vshrl.u32 %v184, 7
    %v186 = vsub.s32 1, %v185
    %v187 = vrot.slane %v178, %v186
    %v188 = vlaneseq
    %v189 = vshrl.u32 %v188, 7
    %v190 = vsub.s32 2, %v189
    %v191 = vrot.slane %v178, %v190
    %v227 = vunpack.c.l.b16 %v146
    %v228 = vunpack.c.h.b16 %v146
    %v229 = vunpack.c.l.b16 %v147
    %v230 = vunpack.c.l.b16 %v148
    %v231 = vunpack.c.h.b16 %v148
    %v232 = vunpack.c.l.b16 %v149
    %v233 = vunpack.c.l.b16 %v150
    %v234 = vunpack.c.h.b16 %v150
    %v235 = vunpack.c.l.b16 %v151
    %v236 = vunpack.c.l.b16 %v152
    %v237 = vunpack.c.h.b16 %v152
    %v238 = vunpack.c.l.b16 %v153
    %v239 = vunpack.c.l.b16 %v154
    %v240 = vunpack.c.h.b16 %v154
    %v241 = vunpack.c.l.b16 %v155
    %v242 = vunpack.c.l.b16 %v156
    %v243 = vunpack.c.h.b16 %v156
    %v244 = vunpack.c.l.b16 %v157
    %v245 = vunpack.c.l.b16 %v158
    %v246 = vunpack.c.h.b16 %v158
    %v247 = vunpack.c.l.b16 %v159
    %v248 = vunpack.c.l.b16 %v160
    %v249 = vunpack.c.h.b16 %v160
    %v250 = vunpack.c.l.b16 %v161
    %v251 = vunpack.c.l.b16 %v162
    %v252 = vunpack.c.h.b16 %v162
    %v253 = vunpack.c.l.b16 %v163
    %v254 = vunpack.c.l.b16 %v164
    %v255 = vunpack.c.h.b16 %v164
    %v256 = vunpack.c.l.b16 %v165
    %v257 = vunpack.c.l.b16 %v166
    %v258 = vunpack.c.h.b16 %v166
    %v259 = vunpack.c.l.b16 %v167
    %v260 = vunpack.c.l.b16 %v168
    %v261 = vunpack.c.h.b16 %v168
    %v262 = vunpack.c.l.b16 %v169
    %v263 = vunpack.c.l.b16 %v170
    %v264 = vunpack.c.h.b16 %v170
    %v265 = vunpack.c.l.b16 %v171
    %v266 = vunpack.c.l.b16 %v172
    %v267 = vunpack.c.h.b16 %v172
    %v268 = vunpack.c.l.b16 %v173
    %v269 = vunpack.c.l.b16 %v174
    %v270 = vunpack.c.h.b16 %v174
    %v271 = vunpack.c.l.b16 %v175
    %v272 = vunpack.c.l.b16 %v176
    %v273 = vunpack.c.h.b16 %v176
    %v274 = vunpack.c.l.b16 %v177
    %v275 = vpack.c.b16 %v230, %v227
    %v276 = vpack.c.b16 %v231, %v228
    %v277 = vpack.c.b16 %v232, %v229
    %v278 = vpack.c.b16 %v236, %v233
    %v279 = vpack.c.b16 %v237, %v234
    %v280 = vpack.c.b16 %v238, %v235
    %v281 = vpack.c.b16 %v242, %v239
    %v282 = vpack.c.b16 %v243, %v240
    %v283 = vpack.c.b16 %v244, %v241
    %v284 = vpack.c.b16 %v248, %v245
    %v285 = vpack.c.b16 %v249, %v246
    %v286 = vpack.c.b16 %v250, %v247
    %v287 = vpack.c.b16 %v254, %v251
    %v288 = vpack.c.b16 %v255, %v252
    %v289 = vpack.c.b16 %v256, %v253
    %v290 = vpack.c.b16 %v260, %v257
    %v291 = vpack.c.b16 %v261, %v258
    %v292 = vpack.c.b16 %v262, %v259
    %v293 = vpack.c.b16 %v266, %v263
    %v294 = vpack.c.b16 %v267, %v264
    %v295 = vpack.c.b16 %v268, %v265
    %v296 = vpack.c.b16 %v272, %v269
    %v297 = vpack.c.b16 %v273, %v270
    %v298 = vpack.c.b16 %v274, %v271
    %323 = vmatprep.subr.bf16.mxu0 %v276
    %324 = vmatpush1.bf16.msra.mxu0 %v275
    %325 = vmatprep.subr.bf16.mxu0 %v279
    %326 = vmatpush1.bf16.msra.mxu0 %v278
    %327 = vmatprep.subr.bf16.mxu0 %v282
    %328 = vmatpush1.bf16.msra.mxu0 %v281
    %329 = vmatprep.subr.bf16.mxu0 %v285
    %330 = vmatpush1.bf16.msra.mxu0 %v284
    %331 = vmatprep.subr.bf16.mxu0 %v288
    %332 = vmatpush1.bf16.msra.mxu0 %v287
    %333 = vmatprep.subr.bf16.mxu0 %v291
    %334 = vmatpush1.bf16.msra.mxu0 %v290
    %335 = vmatprep.subr.bf16.mxu0 %v294
    %336 = vmatpush1.bf16.msra.mxu0 %v293
    %337 = vmatprep.subr.bf16.mxu0 %v297
    %338 = vmatpush1.bf16.msra.mxu0 %v296
    %339 = vmatprep.subr.bf16.mxu0 0
    %340 = vmatpush1.bf16.msra.mxu0 0
    %341 = vmatprep.subr.bf16.mxu0 0
    %342 = vmatpush1.bf16.msra.mxu0 0
    %343 = vmatprep.subr.bf16.mxu0 0
    %344 = vmatpush1.bf16.msra.mxu0 0
    %345 = vmatprep.subr.bf16.mxu0 0
    %346 = vmatpush1.bf16.msra.mxu0 0
    %347 = vmatprep.subr.bf16.mxu0 0
    %348 = vmatpush1.bf16.msra.mxu0 0
    %349 = vmatprep.subr.bf16.mxu0 0
    %350 = vmatpush1.bf16.msra.mxu0 0
    %351 = vmatprep.subr.bf16.mxu0 0
    %352 = vmatpush1.bf16.msra.mxu0 0
    %353 = vmatprep.subr.bf16.mxu0 0
    %354 = vmatpush1.bf16.msra.mxu0 0
    %355 = vmatprep.mubr.bf16.mxu0 0
    %356 = vmatmul.mubr.bf16.gmra.mrb[0].mxu0 %v145
    %v357 = vpop.f32.mrb[0].mxu0
    %v358 = vadd.f32 %v183, %v357
    %v359 = vpop.f32.mrb[0].mxu0
    %v360 = vadd.f32 %v187, %v359
    %v361 = vpop.f32.mrb[0].mxu0
    %v362 = vadd.f32 %v183, %v361
    %v363 = vpop.f32.mrb[0].mxu0
    %v364 = vadd.f32 %v187, %v363
    %365 = vdwg.mxu0
    %366 = vmatprep.subr.bf16.mxu0 0
    %367 = vmatpush1.bf16.msra.mxu0 %v277
    %368 = vmatprep.subr.bf16.mxu0 0
    %369 = vmatpush1.bf16.msra.mxu0 %v280
    %370 = vmatprep.subr.bf16.mxu0 0
    %371 = vmatpush1.bf16.msra.mxu0 %v283
    %372 = vmatprep.subr.bf16.mxu0 0
    %373 = vmatpush1.bf16.msra.mxu0 %v286
    %374 = vmatprep.subr.bf16.mxu0 0
    %375 = vmatpush1.bf16.msra.mxu0 %v289
    %376 = vmatprep.subr.bf16.mxu0 0
    %377 = vmatpush1.bf16.msra.mxu0 %v292
    %378 = vmatprep.subr.bf16.mxu0 0
    %379 = vmatpush1.bf16.msra.mxu0 %v295
    %380 = vmatprep.subr.bf16.mxu0 0
    %381 = vmatpush1.bf16.msra.mxu0 %v298
    %382 = vmatprep.subr.bf16.mxu0 0
    %383 = vmatpush1.bf16.msra.mxu0 0
    %384 = vmatprep.subr.bf16.mxu0 0
    %385 = vmatpush1.bf16.msra.mxu0 0
    %386 = vmatprep.subr.bf16.mxu0 0
    %387 = vmatpush1.bf16.msra.mxu0 0
    %388 = vmatprep.subr.bf16.mxu0 0
    %389 = vmatpush1.bf16.msra.mxu0 0
    %390 = vmatprep.subr.bf16.mxu0 0
    %391 = vmatpush1.bf16.msra.mxu0 0
    %392 = vmatprep.subr.bf16.mxu0 0
    %393 = vmatpush1.bf16.msra.mxu0 0
    %394 = vmatprep.subr.bf16.mxu0 0
    %395 = vmatpush1.bf16.msra.mxu0 0
    %396 = vmatprep.subr.bf16.mxu0 0
    %397 = vmatpush1.bf16.msra.mxu0 0
    %398 = vmatprep.mubr.bf16.mxu0 0
    %399 = vmatmul.mubr.bf16.gmra.mrb[0].mxu0 %v145
    %v400 = vpop.f32.mrb[0].mxu0
    %v401 = vadd.f32 %v191, %v400
    %v402 = vpop.f32.mrb[0].mxu0
    %v403 = vpop.f32.mrb[0].mxu0
    %v404 = vadd.f32 %v191, %v403
    %v405 = vpop.f32.mrb[0].mxu0
    %406 = vdwg.mxu0
    %v407 = vmax.f32 %v358, 0.0
    %v408 = vmax.f32 %v360, 0.0
    %v409 = vmax.f32 %v401, 0.0
    %v410 = vmax.f32 %v362, 0.0
    %v411 = vmax.f32 %v364, 0.0
    %v412 = vmax.f32 %v404, 0.0
    %v413 = vadd.f32 %v407, %v408
    %v414 = vadd.f32 %v410, %v411
    %v415 = vadd.f32 %v413, %v409
    %v416 = vadd.f32 %v414, %v412
    %v417 = vpack.c.bf16 %v416, %v415
    %s418 = scalar_lea.vmem [#allocation8], 192
    %v419 = vld [vmem:[%s418] sm:$0xff]
    %v420 = vld [vmem:[%s418 + $0x8] sm:$0xf]
    %v421 = vld [vmem:[%s418 + $0xc] sm:$0xff]
    %v422 = vld [vmem:[%s418 + $0x14] sm:$0xf]
    %v423 = vld [vmem:[%s418 + $0x18] sm:$0xff]
    %v424 = vld [vmem:[%s418 + $0x20] sm:$0xf]
    %v425 = vld [vmem:[%s418 + $0x24] sm:$0xff]
    %v426 = vld [vmem:[%s418 + $0x2c] sm:$0xf]
    %v427 = vld [vmem:[%s418 + $0x30] sm:$0xff]
    %v428 = vld [vmem:[%s418 + $0x38] sm:$0xf]
    %v429 = vld [vmem:[%s418 + $0x3c] sm:$0xff]
    %v430 = vld [vmem:[%s418 + $0x44] sm:$0xf]
    %v431 = vld [vmem:[%s418 + $0x48] sm:$0xff]
    %v432 = vld [vmem:[%s418 + $0x50] sm:$0xf]
    %v433 = vld [vmem:[%s418 + $0x54] sm:$0xff]
    %v434 = vld [vmem:[%s418 + $0x5c] sm:$0xf]
    %v435 = vld [vmem:[%s418 + $0x60] sm:$0xff]
    %v436 = vld [vmem:[%s418 + $0x68] sm:$0xf]
    %v437 = vld [vmem:[%s418 + $0x6c] sm:$0xff]
    %v438 = vld [vmem:[%s418 + $0x74] sm:$0xf]
    %v439 = vld [vmem:[%s418 + $0x78] sm:$0xff]
    %v440 = vld [vmem:[%s418 + $0x80] sm:$0xf]
    %v441 = vld [vmem:[%s418 + $0x84] sm:$0xff]
    %v442 = vld [vmem:[%s418 + $0x8c] sm:$0xf]
    %v443 = vld [vmem:[%s418 + $0x90] sm:$0xff]
    %v444 = vld [vmem:[%s418 + $0x98] sm:$0xf]
    %v445 = vld [vmem:[%s418 + $0x9c] sm:$0xff]
    %v446 = vld [vmem:[%s418 + $0xa4] sm:$0xf]
    %v447 = vld [vmem:[%s418 + $0xa8] sm:$0xff]
    %v448 = vld [vmem:[%s418 + $0xb0] sm:$0xf]
    %v449 = vld [vmem:[%s418 + $0xb4] sm:$0xff]
    %v450 = vld [vmem:[%s418 + $0xbc] sm:$0xf]
    %s451 = scalar_lea.vmem %s4, 3
    %v452 = vld [vmem:[%s451] sm:$0x7]
    %v454 = vlaneseq
    %v455 = vshrl.u32 %v454, 7
    %v456 = vsub.s32 0, %v455
    %v457 = vrot.slane %v452, %v456
    %v458 = vlaneseq
    %v459 = vshrl.u32 %v458, 7
    %v460 = vsub.s32 1, %v459
    %v461 = vrot.slane %v452, %v460
    %v462 = vlaneseq
    %v463 = vshrl.u32 %v462, 7
    %v464 = vsub.s32 2, %v463
    %v465 = vrot.slane %v452, %v464
    %v501 = vunpack.c.l.b16 %v419
    %v502 = vunpack.c.h.b16 %v419
    %v503 = vunpack.c.l.b16 %v420
    %v504 = vunpack.c.l.b16 %v421
    %v505 = vunpack.c.h.b16 %v421
    %v506 = vunpack.c.l.b16 %v422
    %v507 = vunpack.c.l.b16 %v423
    %v508 = vunpack.c.h.b16 %v423
    %v509 = vunpack.c.l.b16 %v424
    %v510 = vunpack.c.l.b16 %v425
    %v511 = vunpack.c.h.b16 %v425
    %v512 = vunpack.c.l.b16 %v426
    %v513 = vunpack.c.l.b16 %v427
    %v514 = vunpack.c.h.b16 %v427
    %v515 = vunpack.c.l.b16 %v428
    %v516 = vunpack.c.l.b16 %v429
    %v517 = vunpack.c.h.b16 %v429
    %v518 = vunpack.c.l.b16 %v430
    %v519 = vunpack.c.l.b16 %v431
    %v520 = vunpack.c.h.b16 %v431
    %v521 = vunpack.c.l.b16 %v432
    %v522 = vunpack.c.l.b16 %v433
    %v523 = vunpack.c.h.b16 %v433
    %v524 = vunpack.c.l.b16 %v434
    %v525 = vunpack.c.l.b16 %v435
    %v526 = vunpack.c.h.b16 %v435
    %v527 = vunpack.c.l.b16 %v436
    %v528 = vunpack.c.l.b16 %v437
    %v529 = vunpack.c.h.b16 %v437
    %v530 = vunpack.c.l.b16 %v438
    %v531 = vunpack.c.l.b16 %v439
    %v532 = vunpack.c.h.b16 %v439
    %v533 = vunpack.c.l.b16 %v440
    %v534 = vunpack.c.l.b16 %v441
    %v535 = vunpack.c.h.b16 %v441
    %v536 = vunpack.c.l.b16 %v442
    %v537 = vunpack.c.l.b16 %v443
    %v538 = vunpack.c.h.b16 %v443
    %v539 = vunpack.c.l.b16 %v444
    %v540 = vunpack.c.l.b16 %v445
    %v541 = vunpack.c.h.b16 %v445
    %v542 = vunpack.c.l.b16 %v446
    %v543 = vunpack.c.l.b16 %v447
    %v544 = vunpack.c.h.b16 %v447
    %v545 = vunpack.c.l.b16 %v448
    %v546 = vunpack.c.l.b16 %v449
    %v547 = vunpack.c.h.b16 %v449
    %v548 = vunpack.c.l.b16 %v450
    %v549 = vpack.c.b16 %v504, %v501
    %v550 = vpack.c.b16 %v505, %v502
    %v551 = vpack.c.b16 %v506, %v503
    %v552 = vpack.c.b16 %v510, %v507
    %v553 = vpack.c.b16 %v511, %v508
    %v554 = vpack.c.b16 %v512, %v509
    %v555 = vpack.c.b16 %v516, %v513
    %v556 = vpack.c.b16 %v517, %v514
    %v557 = vpack.c.b16 %v518, %v515
    %v558 = vpack.c.b16 %v522, %v519
    %v559 = vpack.c.b16 %v523, %v520
    %v560 = vpack.c.b16 %v524, %v521
    %v561 = vpack.c.b16 %v528, %v525
    %v562 = vpack.c.b16 %v529, %v526
    %v563 = vpack.c.b16 %v530, %v527
    %v564 = vpack.c.b16 %v534, %v531
    %v565 = vpack.c.b16 %v535, %v532
    %v566 = vpack.c.b16 %v536, %v533
    %v567 = vpack.c.b16 %v540, %v537
    %v568 = vpack.c.b16 %v541, %v538
    %v569 = vpack.c.b16 %v542, %v539
    %v570 = vpack.c.b16 %v546, %v543
    %v571 = vpack.c.b16 %v547, %v544
    %v572 = vpack.c.b16 %v548, %v545
    %597 = vmatprep.subr.bf16.mxu0 %v550
    %598 = vmatpush1.bf16.msra.mxu0 %v549
    %599 = vmatprep.subr.bf16.mxu0 %v553
    %600 = vmatpush1.bf16.msra.mxu0 %v552
    %601 = vmatprep.subr.bf16.mxu0 %v556
    %602 = vmatpush1.bf16.msra.mxu0 %v555
    %603 = vmatprep.subr.bf16.mxu0 %v559
    %604 = vmatpush1.bf16.msra.mxu0 %v558
    %605 = vmatprep.subr.bf16.mxu0 %v562
    %606 = vmatpush1.bf16.msra.mxu0 %v561
    %607 = vmatprep.subr.bf16.mxu0 %v565
    %608 = vmatpush1.bf16.msra.mxu0 %v564
    %609 = vmatprep.subr.bf16.mxu0 %v568
    %610 = vmatpush1.bf16.msra.mxu0 %v567
    %611 = vmatprep.subr.bf16.mxu0 %v571
    %612 = vmatpush1.bf16.msra.mxu0 %v570
    %613 = vmatprep.subr.bf16.mxu0 0
    %614 = vmatpush1.bf16.msra.mxu0 0
    %615 = vmatprep.subr.bf16.mxu0 0
    %616 = vmatpush1.bf16.msra.mxu0 0
    %617 = vmatprep.subr.bf16.mxu0 0
    %618 = vmatpush1.bf16.msra.mxu0 0
    %619 = vmatprep.subr.bf16.mxu0 0
    %620 = vmatpush1.bf16.msra.mxu0 0
    %621 = vmatprep.subr.bf16.mxu0 0
    %622 = vmatpush1.bf16.msra.mxu0 0
    %623 = vmatprep.subr.bf16.mxu0 0
    %624 = vmatpush1.bf16.msra.mxu0 0
    %625 = vmatprep.subr.bf16.mxu0 0
    %626 = vmatpush1.bf16.msra.mxu0 0
    %627 = vmatprep.subr.bf16.mxu0 0
    %628 = vmatpush1.bf16.msra.mxu0 0
    %629 = vmatprep.mubr.bf16.mxu0 0
    %630 = vmatmul.mubr.bf16.gmra.mrb[0].mxu0 %v417
    %v631 = vpop.f32.mrb[0].mxu0
    %v632 = vadd.f32 %v457, %v631
    %v633 = vpop.f32.mrb[0].mxu0
    %v634 = vadd.f32 %v461, %v633
    %v635 = vpop.f32.mrb[0].mxu0
    %v636 = vadd.f32 %v457, %v635
    %v637 = vpop.f32.mrb[0].mxu0
    %v638 = vadd.f32 %v461, %v637
    %639 = vdwg.mxu0
    %640 = vmatprep.subr.bf16.mxu0 0
    %641 = vmatpush1.bf16.msra.mxu0 %v551
    %642 = vmatprep.subr.bf16.mxu0 0
    %643 = vmatpush1.bf16.msra.mxu0 %v554
    %644 = vmatprep.subr.bf16.mxu0 0
    %645 = vmatpush1.bf16.msra.mxu0 %v557
    %646 = vmatprep.subr.bf16.mxu0 0
    %647 = vmatpush1.bf16.msra.mxu0 %v560
    %648 = vmatprep.subr.bf16.mxu0 0
    %649 = vmatpush1.bf16.msra.mxu0 %v563
    %650 = vmatprep.subr.bf16.mxu0 0
    %651 = vmatpush1.bf16.msra.mxu0 %v566
    %652 = vmatprep.subr.bf16.mxu0 0
    %653 = vmatpush1.bf16.msra.mxu0 %v569
    %654 = vmatprep.subr.bf16.mxu0 0
    %655 = vmatpush1.bf16.msra.mxu0 %v572
    %656 = vmatprep.subr.bf16.mxu0 0
    %657 = vmatpush1.bf16.msra.mxu0 0
    %658 = vmatprep.subr.bf16.mxu0 0
    %659 = vmatpush1.bf16.msra.mxu0 0
    %660 = vmatprep.subr.bf16.mxu0 0
    %661 = vmatpush1.bf16.msra.mxu0 0
    %662 = vmatprep.subr.bf16.mxu0 0
    %663 = vmatpush1.bf16.msra.mxu0 0
    %664 = vmatprep.subr.bf16.mxu0 0
    %665 = vmatpush1.bf16.msra.mxu0 0
    %666 = vmatprep.subr.bf16.mxu0 0
    %667 = vmatpush1.bf16.msra.mxu0 0
    %668 = vmatprep.subr.bf16.mxu0 0
    %669 = vmatpush1.bf16.msra.mxu0 0
    %670 = vmatprep.subr.bf16.mxu0 0
    %671 = vmatpush1.bf16.msra.mxu0 0
    %672 = vmatprep.mubr.bf16.mxu0 0
    %673 = vmatmul.mubr.bf16.gmra.mrb[0].mxu0 %v417
    %v674 = vpop.f32.mrb[0].mxu0
    %v675 = vadd.f32 %v465, %v674
    %v676 = vpop.f32.mrb[0].mxu0
    %v677 = vpop.f32.mrb[0].mxu0
    %v678 = vadd.f32 %v465, %v677
    %v679 = vpop.f32.mrb[0].mxu0
    %680 = vdwg.mxu0
    %v681 = vmax.f32 %v632, 0.0
    %v682 = vmax.f32 %v634, 0.0
    %v683 = vmax.f32 %v675, 0.0
    %v684 = vmax.f32 %v636, 0.0
    %v685 = vmax.f32 %v638, 0.0
    %v686 = vmax.f32 %v678, 0.0
    %v687 = vadd.f32 %v681, %v682
    %v688 = vadd.f32 %v684, %v685
    %v689 = vadd.f32 %v687, %v683
    %v690 = vadd.f32 %v688, %v686
    %v691 = vpack.c.bf16 %v690, %v689
    %s692 = scalar_lea.vmem [#allocation8], 384
    %v693 = vld [vmem:[%s692] sm:$0xff]
    %v694 = vld [vmem:[%s692 + $0x8] sm:$0xf]
    %v695 = vld [vmem:[%s692 + $0xc] sm:$0xff]
    %v696 = vld [vmem:[%s692 + $0x14] sm:$0xf]
    %v697 = vld [vmem:[%s692 + $0x18] sm:$0xff]
    %v698 = vld [vmem:[%s692 + $0x20] sm:$0xf]
    %v699 = vld [vmem:[%s692 + $0x24] sm:$0xff]
    %v700 = vld [vmem:[%s692 + $0x2c] sm:$0xf]
    %v701 = vld [vmem:[%s692 + $0x30] sm:$0xff]
    %v702 = vld [vmem:[%s692 + $0x38] sm:$0xf]
    %v703 = vld [vmem:[%s692 + $0x3c] sm:$0xff]
    %v704 = vld [vmem:[%s692 + $0x44] sm:$0xf]
    %v705 = vld [vmem:[%s692 + $0x48] sm:$0xff]
    %v706 = vld [vmem:[%s692 + $0x50] sm:$0xf]
    %v707 = vld [vmem:[%s692 + $0x54] sm:$0xff]
    %v708 = vld [vmem:[%s692 + $0x5c] sm:$0xf]
    %v709 = vld [vmem:[%s692 + $0x60] sm:$0xff]
    %v710 = vld [vmem:[%s692 + $0x68] sm:$0xf]
    %v711 = vld [vmem:[%s692 + $0x6c] sm:$0xff]
    %v712 = vld [vmem:[%s692 + $0x74] sm:$0xf]
    %v713 = vld [vmem:[%s692 + $0x78] sm:$0xff]
    %v714 = vld [vmem:[%s692 + $0x80] sm:$0xf]
    %v715 = vld [vmem:[%s692 + $0x84] sm:$0xff]
    %v716 = vld [vmem:[%s692 + $0x8c] sm:$0xf]
    %v717 = vld [vmem:[%s692 + $0x90] sm:$0xff]
    %v718 = vld [vmem:[%s692 + $0x98] sm:$0xf]
    %v719 = vld [vmem:[%s692 + $0x9c] sm:$0xff]
    %v720 = vld [vmem:[%s692 + $0xa4] sm:$0xf]
    %v721 = vld [vmem:[%s692 + $0xa8] sm:$0xff]
    %v722 = vld [vmem:[%s692 + $0xb0] sm:$0xf]
    %v723 = vld [vmem:[%s692 + $0xb4] sm:$0xff]
    %v724 = vld [vmem:[%s692 + $0xbc] sm:$0xf]
    %s725 = scalar_lea.vmem %s4, 6
    %v726 = vld [vmem:[%s725] sm:$0x7]
    %v728 = vlaneseq
    %v729 = vshrl.u32 %v728, 7
    %v730 = vsub.s32 0, %v729
    %v731 = vrot.slane %v726, %v730
    %v732 = vlaneseq
    %v733 = vshrl.u32 %v732, 7
    %v734 = vsub.s32 1, %v733
    %v735 = vrot.slane %v726, %v734
    %v736 = vlaneseq
    %v737 = vshrl.u32 %v736, 7
    %v738 = vsub.s32 2, %v737
    %v739 = vrot.slane %v726, %v738
    %v775 = vunpack.c.l.b16 %v693
    %v776 = vunpack.c.h.b16 %v693
    %v777 = vunpack.c.l.b16 %v694
    %v778 = vunpack.c.l.b16 %v695
    %v779 = vunpack.c.h.b16 %v695
    %v780 = vunpack.c.l.b16 %v696
    %v781 = vunpack.c.l.b16 %v697
    %v782 = vunpack.c.h.b16 %v697
    %v783 = vunpack.c.l.b16 %v698
    %v784 = vunpack.c.l.b16 %v699
    %v785 = vunpack.c.h.b16 %v699
    %v786 = vunpack.c.l.b16 %v700
    %v787 = vunpack.c.l.b16 %v701
    %v788 = vunpack.c.h.b16 %v701
    %v789 = vunpack.c.l.b16 %v702
    %v790 = vunpack.c.l.b16 %v703
    %v791 = vunpack.c.h.b16 %v703
    %v792 = vunpack.c.l.b16 %v704
    %v793 = vunpack.c.l.b16 %v705
    %v794 = vunpack.c.h.b16 %v705
    %v795 = vunpack.c.l.b16 %v706
    %v796 = vunpack.c.l.b16 %v707
    %v797 = vunpack.c.h.b16 %v707
    %v798 = vunpack.c.l.b16 %v708
    %v799 = vunpack.c.l.b16 %v709
    %v800 = vunpack.c.h.b16 %v709
    %v801 = vunpack.c.l.b16 %v710
    %v802 = vunpack.c.l.b16 %v711
    %v803 = vunpack.c.h.b16 %v711
    %v804 = vunpack.c.l.b16 %v712
    %v805 = vunpack.c.l.b16 %v713
    %v806 = vunpack.c.h.b16 %v713
    %v807 = vunpack.c.l.b16 %v714
    %v808 = vunpack.c.l.b16 %v715
    %v809 = vunpack.c.h.b16 %v715
    %v810 = vunpack.c.l.b16 %v716
    %v811 = vunpack.c.l.b16 %v717
    %v812 = vunpack.c.h.b16 %v717
    %v813 = vunpack.c.l.b16 %v718
    %v814 = vunpack.c.l.b16 %v719
    %v815 = vunpack.c.h.b16 %v719
    %v816 = vunpack.c.l.b16 %v720
    %v817 = vunpack.c.l.b16 %v721
    %v818 = vunpack.c.h.b16 %v721
    %v819 = vunpack.c.l.b16 %v722
    %v820 = vunpack.c.l.b16 %v723
    %v821 = vunpack.c.h.b16 %v723
    %v822 = vunpack.c.l.b16 %v724
    %v823 = vpack.c.b16 %v778, %v775
    %v824 = vpack.c.b16 %v779, %v776
    %v825 = vpack.c.b16 %v780, %v777
    %v826 = vpack.c.b16 %v784, %v781
    %v827 = vpack.c.b16 %v785, %v782
    %v828 = vpack.c.b16 %v786, %v783
    %v829 = vpack.c.b16 %v790, %v787
    %v830 = vpack.c.b16 %v791, %v788
    %v831 = vpack.c.b16 %v792, %v789
    %v832 = vpack.c.b16 %v796, %v793
    %v833 = vpack.c.b16 %v797, %v794
    %v834 = vpack.c.b16 %v798, %v795
    %v835 = vpack.c.b16 %v802, %v799
    %v836 = vpack.c.b16 %v803, %v800
    %v837 = vpack.c.b16 %v804, %v801
    %v838 = vpack.c.b16 %v808, %v805
    %v839 = vpack.c.b16 %v809, %v806
    %v840 = vpack.c.b16 %v810, %v807
    %v841 = vpack.c.b16 %v814, %v811
    %v842 = vpack.c.b16 %v815, %v812
    %v843 = vpack.c.b16 %v816, %v813
    %v844 = vpack.c.b16 %v820, %v817
    %v845 = vpack.c.b16 %v821, %v818
    %v846 = vpack.c.b16 %v822, %v819
    %871 = vmatprep.subr.bf16.mxu0 %v824
    %872 = vmatpush1.bf16.msra.mxu0 %v823
    %873 = vmatprep.subr.bf16.mxu0 %v827
    %874 = vmatpush1.bf16.msra.mxu0 %v826
    %875 = vmatprep.subr.bf16.mxu0 %v830
    %876 = vmatpush1.bf16.msra.mxu0 %v829
    %877 = vmatprep.subr.bf16.mxu0 %v833
    %878 = vmatpush1.bf16.msra.mxu0 %v832
    %879 = vmatprep.subr.bf16.mxu0 %v836
    %880 = vmatpush1.bf16.msra.mxu0 %v835
    %881 = vmatprep.subr.bf16.mxu0 %v839
    %882 = vmatpush1.bf16.msra.mxu0 %v838
    %883 = vmatprep.subr.bf16.mxu0 %v842
    %884 = vmatpush1.bf16.msra.mxu0 %v841
    %885 = vmatprep.subr.bf16.mxu0 %v845
    %886 = vmatpush1.bf16.msra.mxu0 %v844
    %887 = vmatprep.subr.bf16.mxu0 0
    %888 = vmatpush1.bf16.msra.mxu0 0
    %889 = vmatprep.subr.bf16.mxu0 0
    %890 = vmatpush1.bf16.msra.mxu0 0
    %891 = vmatprep.subr.bf16.mxu0 0
    %892 = vmatpush1.bf16.msra.mxu0 0
    %893 = vmatprep.subr.bf16.mxu0 0
    %894 = vmatpush1.bf16.msra.mxu0 0
    %895 = vmatprep.subr.bf16.mxu0 0
    %896 = vmatpush1.bf16.msra.mxu0 0
    %897 = vmatprep.subr.bf16.mxu0 0
    %898 = vmatpush1.bf16.msra.mxu0 0
    %899 = vmatprep.subr.bf16.mxu0 0
    %900 = vmatpush1.bf16.msra.mxu0 0
    %901 = vmatprep.subr.bf16.mxu0 0
    %902 = vmatpush1.bf16.msra.mxu0 0
    %903 = vmatprep.mubr.bf16.mxu0 0
    %904 = vmatmul.mubr.bf16.gmra.mrb[0].mxu0 %v691
    %v905 = vpop.f32.mrb[0].mxu0
    %v906 = vadd.f32 %v731, %v905
    %v907 = vpop.f32.mrb[0].mxu0
    %v908 = vadd.f32 %v735, %v907
    %v909 = vpop.f32.mrb[0].mxu0
    %v910 = vadd.f32 %v731, %v909
    %v911 = vpop.f32.mrb[0].mxu0
    %v912 = vadd.f32 %v735, %v911
    %913 = vdwg.mxu0
    %914 = vmatprep.subr.bf16.mxu0 0
    %915 = vmatpush1.bf16.msra.mxu0 %v825
    %916 = vmatprep.subr.bf16.mxu0 0
    %917 = vmatpush1.bf16.msra.mxu0 %v828
    %918 = vmatprep.subr.bf16.mxu0 0
    %919 = vmatpush1.bf16.msra.mxu0 %v831
    %920 = vmatprep.subr.bf16.mxu0 0
    %921 = vmatpush1.bf16.msra.mxu0 %v834
    %922 = vmatprep.subr.bf16.mxu0 0
    %923 = vmatpush1.bf16.msra.mxu0 %v837
    %924 = vmatprep.subr.bf16.mxu0 0
    %925 = vmatpush1.bf16.msra.mxu0 %v840
    %926 = vmatprep.subr.bf16.mxu0 0
    %927 = vmatpush1.bf16.msra.mxu0 %v843
    %928 = vmatprep.subr.bf16.mxu0 0
    %929 = vmatpush1.bf16.msra.mxu0 %v846
    %930 = vmatprep.subr.bf16.mxu0 0
    %931 = vmatpush1.bf16.msra.mxu0 0
    %932 = vmatprep.subr.bf16.mxu0 0
    %933 = vmatpush1.bf16.msra.mxu0 0
    %934 = vmatprep.subr.bf16.mxu0 0
    %935 = vmatpush1.bf16.msra.mxu0 0
    %936 = vmatprep.subr.bf16.mxu0 0
    %937 = vmatpush1.bf16.msra.mxu0 0
    %938 = vmatprep.subr.bf16.mxu0 0
    %939 = vmatpush1.bf16.msra.mxu0 0
    %940 = vmatprep.subr.bf16.mxu0 0
    %941 = vmatpush1.bf16.msra.mxu0 0
    %942 = vmatprep.subr.bf16.mxu0 0
    %943 = vmatpush1.bf16.msra.mxu0 0
    %944 = vmatprep.subr.bf16.mxu0 0
    %945 = vmatpush1.bf16.msra.mxu0 0
    %946 = vmatprep.mubr.bf16.mxu0 0
    %947 = vmatmul.mubr.bf16.gmra.mrb[0].mxu0 %v691
    %v948 = vpop.f32.mrb[0].mxu0
    %v949 = vadd.f32 %v739, %v948
    %v950 = vpop.f32.mrb[0].mxu0
    %v951 = vpop.f32.mrb[0].mxu0
    %v952 = vadd.f32 %v739, %v951
    %v953 = vpop.f32.mrb[0].mxu0
    %954 = vdwg.mxu0
    %v955 = vmax.f32 %v906, 0.0
    %v956 = vmax.f32 %v908, 0.0
    %v957 = vmax.f32 %v949, 0.0
    %v958 = vmax.f32 %v910, 0.0
    %v959 = vmax.f32 %v912, 0.0
    %v960 = vmax.f32 %v952, 0.0
    %v961 = vadd.f32 %v955, %v956
    %v962 = vadd.f32 %v958, %v959
    %v963 = vadd.f32 %v961, %v957
    %v964 = vadd.f32 %v962, %v960
    %v965 = vpack.c.bf16 %v964, %v963
    %v966 = vld [vmem:[#allocation7] sm:$0xf]
    %v967 = vld [vmem:[#allocation7 + $0x4] sm:$0xf]
    %v968 = vld [vmem:[#allocation7 + $0x8] sm:$0xf]
    %v969 = vld [vmem:[#allocation7 + $0xc] sm:$0xf]
    %v970 = vld [vmem:[#allocation7 + $0x10] sm:$0xf]
    %v971 = vld [vmem:[#allocation7 + $0x14] sm:$0xf]
    %v972 = vld [vmem:[#allocation7 + $0x18] sm:$0xf]
    %v973 = vld [vmem:[#allocation7 + $0x1c] sm:$0xf]
    %v974 = vld [vmem:[#allocation7 + $0x20] sm:$0xf]
    %v975 = vld [vmem:[#allocation7 + $0x24] sm:$0xf]
    %v976 = vld [vmem:[#allocation7 + $0x28] sm:$0xf]
    %v977 = vld [vmem:[#allocation7 + $0x2c] sm:$0xf]
    %v978 = vld [vmem:[#allocation7 + $0x30] sm:$0xf]
    %v979 = vld [vmem:[#allocation7 + $0x34] sm:$0xf]
    %v980 = vld [vmem:[#allocation7 + $0x38] sm:$0xf]
    %v981 = vld [vmem:[#allocation7 + $0x3c] sm:$0xf]
    %v998 = vunpack.c.l.b16 %v966
    %v999 = vunpack.c.l.b16 %v967
    %v1000 = vunpack.c.l.b16 %v968
    %v1001 = vunpack.c.l.b16 %v969
    %v1002 = vunpack.c.l.b16 %v970
    %v1003 = vunpack.c.l.b16 %v971
    %v1004 = vunpack.c.l.b16 %v972
    %v1005 = vunpack.c.l.b16 %v973
    %v1006 = vunpack.c.l.b16 %v974
    %v1007 = vunpack.c.l.b16 %v975
    %v1008 = vunpack.c.l.b16 %v976
    %v1009 = vunpack.c.l.b16 %v977
    %v1010 = vunpack.c.l.b16 %v978
    %v1011 = vunpack.c.l.b16 %v979
    %v1012 = vunpack.c.l.b16 %v980
    %v1013 = vunpack.c.l.b16 %v981
    %v1014 = vpack.c.b16 %v999, %v998
    %v1015 = vpack.c.b16 %v1001, %v1000
    %v1016 = vpack.c.b16 %v1003, %v1002
    %v1017 = vpack.c.b16 %v1005, %v1004
    %v1018 = vpack.c.b16 %v1007, %v1006
    %v1019 = vpack.c.b16 %v1009, %v1008
    %v1020 = vpack.c.b16 %v1011, %v1010
    %v1021 = vpack.c.b16 %v1013, %v1012
    %1030 = vmatprep.subr.bf16.mxu0 0
    %1031 = vmatpush1.bf16.msra.mxu0 %v1014
    %1032 = vmatprep.subr.bf16.mxu0 0
    %1033 = vmatpush1.bf16.msra.mxu0 %v1015
    %1034 = vmatprep.subr.bf16.mxu0 0
    %1035 = vmatpush1.bf16.msra.mxu0 %v1016
    %1036 = vmatprep.subr.bf16.mxu0 0
    %1037 = vmatpush1.bf16.msra.mxu0 %v1017
    %1038 = vmatprep.subr.bf16.mxu0 0
    %1039 = vmatpush1.bf16.msra.mxu0 %v1018
    %1040 = vmatprep.subr.bf16.mxu0 0
    %1041 = vmatpush1.bf16.msra.mxu0 %v1019
    %1042 = vmatprep.subr.bf16.mxu0 0
    %1043 = vmatpush1.bf16.msra.mxu0 %v1020
    %1044 = vmatprep.subr.bf16.mxu0 0
    %1045 = vmatpush1.bf16.msra.mxu0 %v1021
    %1046 = vmatprep.subr.bf16.mxu0 0
    %1047 = vmatpush1.bf16.msra.mxu0 0
    %1048 = vmatprep.subr.bf16.mxu0 0
    %1049 = vmatpush1.bf16.msra.mxu0 0
    %1050 = vmatprep.subr.bf16.mxu0 0
    %1051 = vmatpush1.bf16.msra.mxu0 0
    %1052 = vmatprep.subr.bf16.mxu0 0
    %1053 = vmatpush1.bf16.msra.mxu0 0
    %1054 = vmatprep.subr.bf16.mxu0 0
    %1055 = vmatpush1.bf16.msra.mxu0 0
    %1056 = vmatprep.subr.bf16.mxu0 0
    %1057 = vmatpush1.bf16.msra.mxu0 0
    %1058 = vmatprep.subr.bf16.mxu0 0
    %1059 = vmatpush1.bf16.msra.mxu0 0
    %1060 = vmatprep.subr.bf16.mxu0 0
    %1061 = vmatpush1.bf16.msra.mxu0 0
    %1062 = vmatprep.mubr.bf16.mxu0 0
    %1063 = vmatmul.mubr.bf16.gmra.mrb[0].mxu0 %v965
    %v1064 = vpop.f32.mrb[0].mxu0
    %v1065 = vadd.f32 0.0, %v1064
    %v1066 = vpop.f32.mrb[0].mxu0
    %v1067 = vpop.f32.mrb[0].mxu0
    %v1068 = vadd.f32 0.0, %v1067
    %v1069 = vpop.f32.mrb[0].mxu0
    %1070 = vdwg.mxu0
    %1071 = vst [vmem:[#allocation10] sm:$0xff] %v1065
    %1072 = vst [vmem:[#allocation10 + $0x8] sm:$0xff] %v1068
    // Predicated region
    $region38: #{tpu_custom_call.1} parent=1 // pred_check
      _
    $region39: #{tpu_custom_call.1} parent=1 // pred_check_branch
      %1074 = sbr.rel (0) target = $region41
    $region40: #{tpu_custom_call.1} parent=1 // pred_region
      %s1076 = ssub.s32 256, 256
      %1077 = vsyncadd [#allocation4], %s1076
      %s1078 = sshll.u32 [#allocation10], 4
      %s1079 = int_to_ptr.vmem [resolvable:$true] %s1078
      %1084 = dma.vmem_to_hbm [thread:$0]  %s1079, 256, %s5, [#allocation4], 128, 128, 8
    $region41: #{tpu_custom_call.1} parent=1 // pred_fallthru
      _
    // Predicated region
    $region42: #{tpu_custom_call.1} parent=1 // pred_check
      _
    $region43: #{tpu_custom_call.1} parent=1 // pred_check_branch
      %1086 = sbr.rel (0) target = $region45
    $region44: #{tpu_custom_call.1} parent=1 // pred_region
      %1087 = dma.done [#allocation4], 256
    $region45: #{tpu_custom_call.1} parent=1 // pred_fallthru
      _
    %1088 = vsyncpa [#allocation3], 1
    %1089 = vsyncpa [#allocation6], 1
    %1090 = vsyncpa [#allocation9], 1
    %1091 = vsyncpa [#allocation4], 1

</llo_original>
